<compile_context>
chip_gen: v6e
topology: v6e:2x2x1
jax: 0.10.0
libtpu: 0.0.40
codegen_flags: <defaults>
</compile_context>

<pallas_src>
import math

import jax
import jax.numpy as jnp
from jax import lax
from jax.experimental import pallas as pl
from jax.experimental.pallas import tpu as pltpu


# ---------------------------------------------------------------------------
# Small helpers
# ---------------------------------------------------------------------------

def _divisors(n):
    return [d for d in range(1, n + 1) if n % d == 0]


def _const_block_spec(shape):
    """Full-array, grid-invariant operand; single-buffered when supported."""
    index_map = lambda *_: (0,) * len(shape)
    try:
        return pl.BlockSpec(shape, index_map, pipeline_mode=pl.Buffered(1))
    except (TypeError, AttributeError):      # older jax: no pipeline_mode
        return pl.BlockSpec(shape, index_map)


def _vmem_limit_bytes(streamed_block_bytes, resident_bytes):
    """Scoped-VMEM request from the actual block footprint: double-buffered
    streamed blocks + resident operands (counted twice in case single
    buffering is unavailable) + slack."""
    need = 2 * streamed_block_bytes + 2 * resident_bytes + (8 << 20)
    return int(min(max(need, 32 << 20), 60 << 20))


# ---------------------------------------------------------------------------
# use_conv=True : Conv2d(C, C, kernel_size=3, stride=2, padding=1)
# ---------------------------------------------------------------------------

def _conv3x3_s2_kernel(p_ref, w_ref, b_ref, o_ref):
    """One (batch, row-tile) step: a single MXU matmul over packed taps.

    p_ref: (1, TP, 9*Cin)  packed im2col patches (tap-major along K).
    w_ref: (9*Cin, Cout)   tap-major weight matrix (grid-invariant).
    b_ref: (1, Cout)
    o_ref: (1, TP, Cout)   NHWC-flat, lane-dense output tile.
    """
    acc = jnp.dot(p_ref[0], w_ref[...], preferred_element_type=jnp.float32)
    acc = acc + b_ref[...].astype(jnp.float32)      # bias added exactly once
    o_ref[0] = acc.astype(o_ref.dtype)


def _pick_conv_row_tile(ho, wo, kdim, cout, itemsize, budget=10 << 20):
    """Largest TH (divisor of ho, (TH*wo)%8==0 or TH==ho) whose double-buffered
    streamed blocks fit in `budget` bytes."""
    cand = [t for t in _divisors(ho) if (t * wo) % 8 == 0 or t == ho]
    per_row = 2 * wo * (kdim + cout) * itemsize      # in + out, x2 buffers
    fitting = [t for t in cand if t * per_row <= budget]
    return max(fitting) if fitting else min(cand)


@jax.jit
def _conv3x3_s2_forward(x, w_mat, bias_row):
    """x: (B, C, H, W) NCHW -> Conv2d(C, C, 3, stride=2, padding=1), NCHW."""
    B, Cin, H, W = x.shape
    Cout = w_mat.shape[1]
    Ho = (H - 1) // 2 + 1
    Wo = (W - 1) // 2 + 1
    P = Ho * Wo
    K = 9 * Cin
    itemsize = x.dtype.itemsize

    # TODO(synk): the NCHW<->NHWC transposes and the packed-tap materialization
    # are XLA-side HBM passes; keeping NHWC end-to-end in the surrounding model
    # (or a manual pl.ANY halo-slab DMA pipeline) would remove them.
    xp = jnp.pad(jnp.transpose(x, (0, 2, 3, 1)),
                 ((0, 0), (1, 1), (1, 1), (0, 0)))
    taps = [xp[:, kh:kh + 2 * Ho:2, kw:kw + 2 * Wo:2, :]
            for kh in range(3) for kw in range(3)]            # 9 x (B,Ho,Wo,Cin)
    patches = jnp.concatenate(taps, axis=-1).reshape(B, P, K)  # (B, P, 9*Cin)

    TH = _pick_conv_row_tile(Ho, Wo, K, Cout, itemsize)
    TP = TH * Wo
    grid = (B, Ho // TH)

    in_specs = [
        pl.BlockSpec((1, TP, K), lambda b, t: (b, t, 0)),
        _const_block_spec((K, Cout)),
        _const_block_spec((1, Cout)),
    ]
    out_specs = pl.BlockSpec((1, TP, Cout), lambda b, t: (b, t, 0))

    cost = pl.CostEstimate(
        flops=2 * B * P * K * Cout,
        transcendentals=0,
        bytes_accessed=(B * P * K + K * Cout + Cout + B * P * Cout) * itemsize)

    vmem_limit = _vmem_limit_bytes(
        streamed_block_bytes=TP * (K + Cout) * itemsize,
        resident_bytes=(K * Cout + Cout) * itemsize)

    out_flat = pl.pallas_call(
        _conv3x3_s2_kernel,
        out_shape=jax.ShapeDtypeStruct((B, P, Cout), x.dtype),
        grid=grid,
        in_specs=in_specs,
        out_specs=out_specs,
        compiler_params=pltpu.CompilerParams(
            dimension_semantics=("parallel", "parallel"),
            vmem_limit_bytes=vmem_limit),
        cost_estimate=cost,
    )(patches, w_mat, bias_row)

    return jnp.transpose(out_flat.reshape(B, Ho, Wo, Cout), (0, 3, 1, 2))


# ---------------------------------------------------------------------------
# use_conv=False : AvgPool2d (kernel_size=2, stride=2 assumed)
# ---------------------------------------------------------------------------

def _avgpool2x2_kernel(x_ref, cm_ref, o_ref):
    """x_ref: (TN, TH, 4*Wo) -- each row holds original rows 2i and 2i+1 back
    to back; cm_ref: (4*Wo, Wo) constant pooling matrix (four 0.25 entries per
    column); o_ref: (TN, TH, Wo).  The kernel is HBM-bound, so reducing the
    window on the otherwise-idle MXU (HIGHEST precision, ~f32 exact) is free
    at realistic spatial sizes."""
    blk = x_ref[...]
    tn, th, w4 = blk.shape
    out = jnp.dot(blk.reshape(tn * th, w4), cm_ref[...],
                  precision=lax.Precision.HIGHEST,
                  preferred_element_type=jnp.float32)
    o_ref[...] = out.reshape(tn, th, -1).astype(o_ref.dtype)


def _pick_pool_tiles(n, ho, wo, itemsize, budget=6 << 20):
    """Byte-budgeted (TN, TH) with TN|n, TH|ho and TH%8==0 or TH==ho."""
    ths = [t for t in _divisors(ho) if t % 8 == 0 or t == ho]
    tns = _divisors(n)
    per = 2 * 5 * wo * itemsize            # (4*wo in + wo out) x2 buffers
    best, best_sz = (min(tns), min(ths)), 0
    for th in ths:
        for tn in tns:
            if tn * th * per <= budget and tn * th > best_sz:
                best, best_sz = (tn, th), tn * th
    return best


@jax.jit
def _avgpool2x2_forward(x):
    B, C, H, W = x.shape
    Ho, Wo = H // 2, W // 2                # floor mode (PyTorch default)
    N = B * C
    itemsize = x.dtype.itemsize

    # Free reshape (after the floor-mode crop): row i of xr = [row 2i | row 2i+1].
    xr = x[:, :, :2 * Ho, :2 * Wo].reshape(N, Ho, 4 * Wo)

    # (4*Wo, Wo) pooling matrix: column j averages lanes {2j,2j+1,2Wo+2j,2Wo+2j+1}.
    eye2 = jnp.repeat(jnp.eye(Wo, dtype=x.dtype), 2, axis=0)   # (2*Wo, Wo)
    cm = jnp.concatenate([eye2, eye2], axis=0) * jnp.asarray(0.25, x.dtype)

    TN, TH = _pick_pool_tiles(N, Ho, Wo, itemsize)
    grid = (N // TN, Ho // TH)

    in_specs = [pl.BlockSpec((TN, TH, 4 * Wo), lambda n, t: (n, t, 0)),
                _const_block_spec((4 * Wo, Wo))]
    out_specs = pl.BlockSpec((TN, TH, Wo), lambda n, t: (n, t, 0))

    cost = pl.CostEstimate(
        flops=2 * N * Ho * 4 * Wo * Wo,
        transcendentals=0,
        bytes_accessed=(N * Ho * 4 * Wo + 4 * Wo * Wo + N * Ho * Wo) * itemsize)

    vmem_limit = _vmem_limit_bytes(
        streamed_block_bytes=TN * TH * 5 * Wo * itemsize,
        resident_bytes=4 * Wo * Wo * itemsize)

    out = pl.pallas_call(
        _avgpool2x2_kernel,
        out_shape=jax.ShapeDtypeStruct((N, Ho, Wo), x.dtype),
        grid=grid,
        in_specs=in_specs,
        out_specs=out_specs,
        compiler_params=pltpu.CompilerParams(
            dimension_semantics=("parallel", "parallel"),
            vmem_limit_bytes=vmem_limit),
        cost_estimate=cost,
    )(xr, cm)
    return out.reshape(B, C, Ho, Wo)


# ---------------------------------------------------------------------------
# Module wrapper
# ---------------------------------------------------------------------------

class Downsample:
    """JAX/Pallas port of the PyTorch Downsample module (NCHW API)."""

    def __init__(self, channels, use_conv, key=None, dtype=jnp.float32):
        self.channels = channels
        self.use_conv = use_conv
        if use_conv:
            # nn.Conv2d(channels, channels, 3, stride=2, padding=1) default
            # init: U(-1/sqrt(fan_in), 1/sqrt(fan_in)).
            key = jax.random.PRNGKey(0) if key is None else key
            kw_key, kb_key = jax.random.split(key)
            fan_in = channels * 3 * 3
            bound = 1.0 / math.sqrt(fan_in)
            self.weight = jax.random.uniform(
                kw_key, (channels, channels, 3, 3), dtype, -bound, bound)  # OIHW
            self.bias = jax.random.uniform(kb_key, (channels,), dtype, -bound, bound)
            # Kernel-ready layouts hoisted to __init__: tap-major (9*Cin, Cout)
            # matrix matching the packed-patch K ordering, and (1, Cout) bias.
            self._w_mat = jnp.transpose(self.weight, (2, 3, 1, 0)).reshape(
                9 * channels, channels)
            self._bias_row = self.bias.reshape(1, channels)
        else:
            self.weight = None
            self.bias = None

    def __call__(self, x):
        B, C, H, W = x.shape
        assert C == self.channels
        if self.use_conv:
            return _conv3x3_s2_forward(x, self._w_mat, self._bias_row)
        # TODO(synk): the reference `nn.AvgPool2d(stride=2)` omits kernel_size
        # (raises in PyTorch); we assume kernel_size=2, stride=2.
        return _avgpool2x2_forward(x)


# ---------------------------------------------------------------------------
# References + self-test
# ---------------------------------------------------------------------------

def _conv_reference(x, weight, bias):
    y = lax.conv_general_dilated(
        x, weight,
        window_strides=(2, 2),
        padding=((1, 1), (1, 1)),
        dimension_numbers=("NCHW", "OIHW", "NCHW"),
        precision=lax.Precision.HIGHEST,
    )
    return y + bias.reshape(1, -1, 1, 1)


def _avgpool_reference(x):
    B, C, H, W = x.shape
    return x.reshape(B, C, H // 2, 2, W // 2, 2).mean(axis=(3, 5))


if __name__ == "__main__":
    key = jax.random.PRNGKey(0)
    kx, kp = jax.random.split(key)
    B, C, H, W = 2, 4, 16, 16
    x = jax.random.normal(kx, (B, C, H, W), jnp.float32)

    # --- use_conv=True path: Conv2d(C, C, 3, stride=2, padding=1) ---
    ds_conv = Downsample(C, use_conv=True, key=kp)
    y_conv = jax.block_until_ready(ds_conv(x))
    y_conv_ref = _conv_reference(x, ds_conv.weight, ds_conv.bias)
    assert y_conv.shape == (B, C, H // 2, W // 2)
    # DEFAULT (bf16-MXU) matmul precision vs HIGHEST-precision reference:
    # tolerance loosened per the review's correctness note.
    conv_err = float(jnp.max(jnp.abs(y_conv - y_conv_ref)))
    assert conv_err < 3e-2, conv_err

    # --- use_conv=False path: AvgPool2d (kernel_size=2, stride=2 assumed) ---
    ds_pool = Downsample(C, use_conv=False)
    y_pool = jax.block_until_ready(ds_pool(x))
    y_pool_ref = _avgpool_reference(x)
    assert y_pool.shape == (B, C, H // 2, W // 2)
    assert jnp.allclose(y_pool, y_pool_ref, atol=1e-4, rtol=1e-4)

    print("KERNEL_OK")
</pallas_src>

<mosaic_0001>
module attributes {stable_mosaic.version = 11 : i64} {
  func.func @_conv3x3_s2_kernel(%arg0: i32, %arg1: i32, %arg2: memref<1x64x36xf32, #tpu.memory_space<vmem>>, %arg3: memref<36x4xf32, #tpu.memory_space<vmem>>, %arg4: memref<1x4xf32, #tpu.memory_space<vmem>>, %arg5: memref<1x64x4xf32, #tpu.memory_space<vmem>>) attributes {dimension_semantics = [#tpu.dimension_semantics<parallel>, #tpu.dimension_semantics<parallel>], iteration_bounds = array<i64: 2, 1>, scalar_prefetch = 0 : i64, scratch_operands = 0 : i64, tpu.core_type = #tpu.core_type<tc>, window_params = [{transform_indices = @transform_0, window_bounds = array<i64: 1, 64, 36>}, {pipeline_mode = #tpu.pipeline_mode<synchronous>, transform_indices = @transform_1, window_bounds = array<i64: 36, 4>}, {pipeline_mode = #tpu.pipeline_mode<synchronous>, transform_indices = @transform_2, window_bounds = array<i64: 1, 4>}, {transform_indices = @transform_3, window_bounds = array<i64: 1, 64, 4>}]} {
    %c0 = arith.constant 0 : index
    %c0_0 = arith.constant 0 : index
    %c0_1 = arith.constant 0 : index
    %0 = vector.load %arg2[%c0, %c0_0, %c0_1] : memref<1x64x36xf32, #tpu.memory_space<vmem>>, vector<1x64x36xf32>
    %1 = vector.shape_cast %0 : vector<1x64x36xf32> to vector<64x36xf32>
    %c0_2 = arith.constant 0 : index
    %c0_3 = arith.constant 0 : index
    %2 = vector.load %arg3[%c0_2, %c0_3] : memref<36x4xf32, #tpu.memory_space<vmem>>, vector<36x4xf32>
    %cst = arith.constant dense<0.000000e+00> : vector<64x4xf32>
    %3 = tpu.matmul %1, %2, %cst {dimension_numbers = #tpu.dot_dimension_numbers<[1], [0], [0], [1], [0, 0, 1, 1], [], []>} : vector<64x36xf32>, vector<36x4xf32>, vector<64x4xf32> -> vector<64x4xf32>
    %c0_4 = arith.constant 0 : index
    %c0_5 = arith.constant 0 : index
    %4 = vector.load %arg4[%c0_4, %c0_5] : memref<1x4xf32, #tpu.memory_space<vmem>>, vector<1x4xf32>
    %5 = vector.broadcast %4 : vector<1x4xf32> to vector<64x4xf32>
    %6 = arith.addf %3, %5 : vector<64x4xf32>
    %c0_6 = arith.constant 0 : index
    %c0_7 = arith.constant 0 : index
    %c0_8 = arith.constant 0 : index
    %7 = vector.load %arg5[%c0_6, %c0_7, %c0_8] : memref<1x64x4xf32, #tpu.memory_space<vmem>>, vector<1x64x4xf32>
    %8 = vector.shape_cast %7 : vector<1x64x4xf32> to vector<64x4xf32>
    %9 = vector.shape_cast %6 : vector<64x4xf32> to vector<1x64x4xf32>
    tpu.vector_store %arg5[%c0_6, %c0_7, %c0_8], %9 {strides = array<i32>} : memref<1x64x4xf32, #tpu.memory_space<vmem>>, vector<1x64x4xf32>,
    return
  }
  func.func @transform_0(%arg0: i32, %arg1: i32) -> (i32, i32, i32) {
    %c0_i32 = arith.constant 0 : i32
    %c0_i32_0 = arith.constant 0 : i32
    return %arg0, %arg1, %c0_i32 : i32, i32, i32
  }
  func.func @transform_1(%arg0: i32, %arg1: i32) -> (i32, i32) {
    %c0_i32 = arith.constant 0 : i32
    %c0_i32_0 = arith.constant 0 : i32
    %c0_i32_1 = arith.constant 0 : i32
    return %c0_i32, %c0_i32_0 : i32, i32
  }
  func.func @transform_2(%arg0: i32, %arg1: i32) -> (i32, i32) {
    %c0_i32 = arith.constant 0 : i32
    %c0_i32_0 = arith.constant 0 : i32
    %c0_i32_1 = arith.constant 0 : i32
    return %c0_i32, %c0_i32_0 : i32, i32
  }
  func.func @transform_3(%arg0: i32, %arg1: i32) -> (i32, i32, i32) {
    %c0_i32 = arith.constant 0 : i32
    %c0_i32_0 = arith.constant 0 : i32
    return %arg0, %arg1, %c0_i32 : i32, i32, i32
  }
}

</mosaic_0001>

<llo_original>
// kernel: _conv3x3_s2_forward.1
$region0: #{_conv3x3_s2_forward.1}
  #allocation0 [shape = 'u32[]', space=smem, size = 0x4, offset = 0x4, fixed_abs, tag = 'smem constant byte address 0x4 - core index']
  #allocation1 [shape = 'u32[144,128]{1,0:T(1,128)}', space=vmem, size = 0x12000, scoped, tag = 'internal scratch']
  %s0 = inlined_call_operand.vmem [shape: f32[2,64,36], index: 0, kind: input, shape index: {}]
  %s1 = inlined_call_operand.vmem [shape: f32[36,4], index: 1, kind: input, shape index: {}]
  %s2 = inlined_call_operand.vmem [shape: f32[1,4], index: 2, kind: input, shape index: {}]
  %s3 = inlined_call_operand.vmem [shape: f32[2,64,4], index: 3, kind: output, shape index: {}]
  %s4 = sld [smem:[#allocation0]]
  $region45: #{_conv3x3_s2_forward.1} parent=0
    _
  %s6 = ssub.s32 1, %s4
  %s7 = scalar_select 0, %s6, %s4
  loop: start=0, step=1, limit=4
  $region2: #{_conv3x3_s2_forward.1} parent=0 // loop_pre_header
    _
  $region3: #{_conv3x3_s2_forward.1} parent=0 // loop_header
    %s9 = sphi 0, %s13
    %p10 = scmp.ge.s32.totalorder %s9, 4
    %s16 = sphi 0, %s28
    %s17 = sphi 0, %s24
    %s18 = sphi 0, %s16
    %s19 = sphi 0, %s17
    %s20 = sphi 0, %s18
    %s21 = sphi 0, %s19
    %s33 = sphi 0, %s35
    %s36 = sphi 0, %s33
    %s37 = sphi 0, %s36
    %s53 = sphi 0, %s37
    %s57 = sphi 0, %s57
    %s59 = sphi 0, %s57
    %s60 = sphi 0, %s59
    %s74 = sphi 0, %s60
    %s78 = sphi 0, %s78
    %s80 = sphi 0, %s78
    %s81 = sphi 0, %s80
    %s95 = sphi 0, %s81
    %s103 = sphi 0, %s105
    %s106 = sphi 0, %s103
    %s107 = sphi 0, %s106
    %s123 = sphi 0, %s107
  $region4: #{_conv3x3_s2_forward.1} parent=0 // loop_header_branch
    %12 = sbr.rel (%p10) target = $region8
  $region5: #{_conv3x3_s2_forward.1} parent=0 // loop_body
    %s14 = ssub.s32 %s9, 1
    %s15 = ssub.s32 %s9, 2
    %s22 = sadd.s32 1, %s17
    %p23 = scmp.ge.s32.totalorder %s22, 1
    %s24 = scalar_select %p23, 0, %s22
    %s25 = sadd.s32 1, %s16
    %s26 = scalar_select %p23, %s25, %s16
    %p27 = scmp.ge.s32.totalorder %s26, 2
    %s28 = scalar_select %p27, 0, %s26
    %s29 = ssub.s32 %s16, %s28
    %s30 = ssub.s32 %s17, %s24
    %s31 = sor.u32 %s29, %s30
    %p32 = scmp.eq.s32.totalorder %s31, 0
    %s34 = sadd.s32 %s33, 1
    %s35 = scalar_select %p32, %s33, %s34
    %p38 = pneg %p32
    %p39 = scmp.eq.s32.totalorder %s9, 1
    %p40 = por %p38, %p39
    %p41 = scmp.ne.s32.totalorder %s33, %s36
    %p42 = scmp.eq.s32.totalorder %s9, 0
    %p43 = por %p41, %p42
    %p44 = scmp.ne.s32.totalorder %s33, %s36
    %p45 = scmp.eq.s32.totalorder %s14, 1
    %p46 = por %p44, %p45
    %p47 = scmp.ne.s32.totalorder %s36, %s37
    %p48 = scmp.eq.s32.totalorder %s14, 0
    %p49 = por %p47, %p48
    %p50 = scmp.ne.s32.totalorder %s36, %s37
    %p51 = scmp.eq.s32.totalorder %s15, 1
    %p52 = por %p50, %p51
    %p54 = scmp.ne.s32.totalorder %s37, %s53
    %p55 = scmp.eq.s32.totalorder %s15, 0
    %p56 = por %p54, %p55
    %s58 = sadd.s32 %s57, 1
    %p61 = scmp.eq.s32.totalorder %s9, 1
    %p62 = scmp.ne.s32.totalorder %s57, %s59
    %p63 = scmp.eq.s32.totalorder %s9, 0
    %p64 = por %p62, %p63
    %p65 = scmp.ne.s32.totalorder %s57, %s59
    %p66 = scmp.eq.s32.totalorder %s14, 1
    %p67 = por %p65, %p66
    %p68 = scmp.ne.s32.totalorder %s59, %s60
    %p69 = scmp.eq.s32.totalorder %s14, 0
    %p70 = por %p68, %p69
    %p71 = scmp.ne.s32.totalorder %s59, %s60
    %p72 = scmp.eq.s32.totalorder %s15, 1
    %p73 = por %p71, %p72
    %p75 = scmp.ne.s32.totalorder %s60, %s74
    %p76 = scmp.eq.s32.totalorder %s15, 0
    %p77 = por %p75, %p76
    %s79 = sadd.s32 %s78, 1
    %p82 = scmp.eq.s32.totalorder %s9, 1
    %p83 = scmp.ne.s32.totalorder %s78, %s80
    %p84 = scmp.eq.s32.totalorder %s9, 0
    %p85 = por %p83, %p84
    %p86 = scmp.ne.s32.totalorder %s78, %s80
    %p87 = scmp.eq.s32.totalorder %s14, 1
    %p88 = por %p86, %p87
    %p89 = scmp.ne.s32.totalorder %s80, %s81
    %p90 = scmp.eq.s32.totalorder %s14, 0
    %p91 = por %p89, %p90
    %p92 = scmp.ne.s32.totalorder %s80, %s81
    %p93 = scmp.eq.s32.totalorder %s15, 1
    %p94 = por %p92, %p93
    %p96 = scmp.ne.s32.totalorder %s81, %s95
    %p97 = scmp.eq.s32.totalorder %s15, 0
    %p98 = por %p96, %p97
    %s99 = ssub.s32 %s16, %s28
    %s100 = ssub.s32 %s17, %s24
    %s101 = sor.u32 %s99, %s100
    %p102 = scmp.eq.s32.totalorder %s101, 0
    %s104 = sadd.s32 %s103, 1
    %s105 = scalar_select %p102, %s103, %s104
    %p108 = pneg %p102
    %p109 = scmp.eq.s32.totalorder %s9, 1
    %p110 = por %p108, %p109
    %p111 = scmp.ne.s32.totalorder %s103, %s106
    %p112 = scmp.eq.s32.totalorder %s9, 0
    %p113 = por %p111, %p112
    %p114 = scmp.ne.s32.totalorder %s103, %s106
    %p115 = scmp.eq.s32.totalorder %s14, 1
    %p116 = por %p114, %p115
    %p117 = scmp.ne.s32.totalorder %s106, %s107
    %p118 = scmp.eq.s32.totalorder %s14, 0
    %p119 = por %p117, %p118
    %p120 = scmp.ne.s32.totalorder %s106, %s107
    %p121 = scmp.eq.s32.totalorder %s15, 1
    %p122 = por %p120, %p121
    %p124 = scmp.ne.s32.totalorder %s107, %s123
    %p125 = scmp.eq.s32.totalorder %s15, 0
    %p126 = por %p124, %p125
    %p127 = scmp.le.s32.totalorder 1, %s9
    %p128 = scmp.lt.s32.totalorder %s9, 3
    %p129 = pnand %p127, %p128
    %p130 = pneg %p129
    // Predicated region
    $region9: #{_conv3x3_s2_forward.1} parent=5 // pred_check
      _
    $region10: #{_conv3x3_s2_forward.1} parent=5 // pred_check_branch
      %132 = sbr.rel (%p129) target = $region12
    $region11: #{_conv3x3_s2_forward.1} parent=5 // pred_region
      %s133 = ssub.s32 %s9, 1
      // Predicated region
      $region13: #{_conv3x3_s2_forward.1} parent=11 // pred_check
        %p134 = pneg %p70
      $region14: #{_conv3x3_s2_forward.1} parent=11 // pred_check_branch
        %136 = sbr.rel (%p134) target = $region16
      $region15: #{_conv3x3_s2_forward.1} parent=11 // pred_region
        _
      $region16: #{_conv3x3_s2_forward.1} parent=11 // pred_fallthru
        _
      // Predicated region
      $region17: #{_conv3x3_s2_forward.1} parent=11 // pred_check
        %p137 = pneg %p91
      $region18: #{_conv3x3_s2_forward.1} parent=11 // pred_check_branch
        %139 = sbr.rel (%p137) target = $region20
      $region19: #{_conv3x3_s2_forward.1} parent=11 // pred_region
        _
      $region20: #{_conv3x3_s2_forward.1} parent=11 // pred_fallthru
        _
    $region12: #{_conv3x3_s2_forward.1} parent=5 // pred_fallthru
      _
    %p140 = scmp.lt.s32.totalorder %s9, 2
    // Predicated region
    $region21: #{_conv3x3_s2_forward.1} parent=5 // pred_check
      %p141 = pneg %p140
    $region22: #{_conv3x3_s2_forward.1} parent=5 // pred_check_branch
      %143 = sbr.rel (%p141) target = $region24
    $region23: #{_conv3x3_s2_forward.1} parent=5 // pred_region
      // Predicated region
      $region25: #{_conv3x3_s2_forward.1} parent=23 // pred_check
        %p144 = pneg %p43
      $region26: #{_conv3x3_s2_forward.1} parent=23 // pred_check_branch
        %146 = sbr.rel (%p144) target = $region28
      $region27: #{_conv3x3_s2_forward.1} parent=23 // pred_region
        %s147 = smul.u32 8, %s17
        %p148 = scmp.lt.s32.totalorder %s16, 1
        %s149 = scalar_select %p148, %s16, 1
        %p150 = scmp.lt.s32.totalorder %s147, 7
        %s151 = scalar_select %p150, %s147, 7
        %s152 = smul.addr %s149, 8
        %s153 = sadd.s32 %s151, %s152
        %s154 = smul.addr %s153, 8
        %s155 = scalar_lea.vmem %s0, %s154
        %s156 = smul.u32 8, %s17
      $region28: #{_conv3x3_s2_forward.1} parent=23 // pred_fallthru
        _
    $region24: #{_conv3x3_s2_forward.1} parent=5 // pred_fallthru
      _
    %p157 = scmp.le.s32.totalorder 1, %s9
    %p158 = scmp.lt.s32.totalorder %s9, 3
    %p159 = pnand %p157, %p158
    %p160 = pneg %p159
    // Predicated region
    $region29: #{_conv3x3_s2_forward.1} parent=5 // pred_check
      _
    $region30: #{_conv3x3_s2_forward.1} parent=5 // pred_check_branch
      %162 = sbr.rel (%p159) target = $region32
    $region31: #{_conv3x3_s2_forward.1} parent=5 // pred_region
      %s163 = ssub.s32 %s9, 1
      %s164 = smul.u32 8, %s19
      %p165 = scmp.lt.s32.totalorder %s18, 1
      %s166 = scalar_select %p165, %s18, 1
      %p167 = scmp.lt.s32.totalorder %s164, 7
      %s168 = scalar_select %p167, %s164, 7
      %s169 = smul.addr %s166, 8
      %s170 = sadd.s32 %s168, %s169
      %s171 = smul.addr %s170, 8
      %s172 = scalar_lea.vmem %s0, %s171
      %p173 = pneg %p49
      %p174 = pneg %p46
      %p175 = pneg %p70
      %p176 = pneg %p67
      %p177 = pneg %p91
      %p178 = pneg %p88
      %p179 = pneg %p119
      %p180 = pneg %p116
      %s181 = smul.u32 8, %s19
      %p182 = scmp.lt.s32.totalorder %s18, 1
      %s183 = scalar_select %p182, %s18, 1
      %p184 = scmp.lt.s32.totalorder %s181, 7
      %s185 = scalar_select %p184, %s181, 7
      %s186 = smul.addr %s183, 8
      %s187 = sadd.s32 %s185, %s186
      %s188 = smul.addr %s187, 8
      %s189 = scalar_lea.vmem %s3, %s188
      %s190 = smul.u32 8, %s19
      %p191 = scmp.lt.s32.totalorder %s18, 1
      %s192 = scalar_select %p191, %s18, 1
      %p193 = scmp.lt.s32.totalorder %s190, 7
      %s194 = scalar_select %p193, %s190, 7
      %s195 = smul.addr %s192, 8
      %s196 = sadd.s32 %s194, %s195
      %s197 = smul.addr %s196, 8
      %s198 = scalar_lea.vmem %s0, %s197
      %s199 = smul.u32 8, %s19
      %s200 = smul.u32 8, %s19
      %p201 = scmp.lt.s32.totalorder %s18, 1
      %s202 = scalar_select %p201, %s18, 1
      %p203 = scmp.lt.s32.totalorder %s200, 7
      %s204 = scalar_select %p203, %s200, 7
      %s205 = smul.addr %s202, 8
      %s206 = sadd.s32 %s204, %s205
      %s207 = smul.addr %s206, 8
      %s208 = scalar_lea.vmem %s3, %s207
      %s209 = smul.u32 8, %s19
      %v210 = vld [vmem:[%s198] sm:$0xff]
      %v211 = vld [vmem:[%s198 + $0x8] sm:$0xff]
      %v212 = vld [vmem:[%s198 + $0x10] sm:$0xff]
      %v213 = vld [vmem:[%s198 + $0x18] sm:$0xff]
      %v214 = vld [vmem:[%s198 + $0x20] sm:$0xff]
      %v215 = vld [vmem:[%s198 + $0x28] sm:$0xff]
      %v216 = vld [vmem:[%s198 + $0x30] sm:$0xff]
      %v217 = vld [vmem:[%s198 + $0x38] sm:$0xff]
      %v218 = vld [vmem:[%s1] sm:$0xff]
      %v219 = vld [vmem:[%s1 + $0x8] sm:$0xff]
      %v220 = vld [vmem:[%s1 + $0x10] sm:$0xff]
      %v221 = vld [vmem:[%s1 + $0x18] sm:$0xff]
      %v222 = vld [vmem:[%s1 + $0x20] sm:$0xf]
      %v223 = vld [vmem:[%s2] sm:$0x1]
      %v225 = vlaneseq
      %v226 = vshrl.u32 %v225, 7
      %v227 = vsub.s32 0, %v226
      %v228 = vrot.slane %v223, %v227
      %vm230 = vcmask 293888
      %v232 = vsel %vm230, %v210, 0
      %v235 = vsel %vm230, %v211, 0
      %v238 = vsel %vm230, %v212, 0
      %v241 = vsel %vm230, %v213, 0
      %v244 = vsel %vm230, %v214, 0
      %v247 = vsel %vm230, %v215, 0
      %v250 = vsel %vm230, %v216, 0
      %v253 = vsel %vm230, %v217, 0
      %vm255 = vcmask 1043456
      %v257 = vsel %vm255, %v222, 0
      %259 = vmatprep.subr.mxu0 0.0
      %260 = vmatpush1.msra.mxu0 0.0
      %261 = vmatprep.subr.mxu0 0.0
      %262 = vmatpush1.msra.mxu0 0.0
      %263 = vmatprep.subr.mxu0 0.0
      %264 = vmatpush1.msra.mxu0 0.0
      %265 = vmatprep.subr.mxu0 0.0
      %266 = vmatpush1.msra.mxu0 0.0
      %267 = vmatprep.subr.mxu0 0.0
      %268 = vmatpush1.msra.mxu0 0.0
      %269 = vmatprep.subr.mxu0 0.0
      %270 = vmatpush1.msra.mxu0 0.0
      %271 = vmatprep.subr.mxu0 0.0
      %272 = vmatpush1.msra.mxu0 0.0
      %273 = vmatprep.subr.mxu0 0.0
      %274 = vmatpush1.msra.mxu0 0.0
      %275 = vmatprep.subr.mxu0 0.0
      %276 = vmatpush1.msra.mxu0 0.0
      %277 = vmatprep.subr.mxu0 0.0
      %278 = vmatpush1.msra.mxu0 0.0
      %279 = vmatprep.subr.mxu0 0.0
      %280 = vmatpush1.msra.mxu0 0.0
      %281 = vmatprep.subr.mxu0 0.0
      %282 = vmatpush1.msra.mxu0 %v257
      %283 = vmatprep.subr.mxu0 0.0
      %284 = vmatpush1.msra.mxu0 %v221
      %285 = vmatprep.subr.mxu0 0.0
      %286 = vmatpush1.msra.mxu0 %v220
      %287 = vmatprep.subr.mxu0 0.0
      %288 = vmatpush1.msra.mxu0 %v219
      %289 = vmatprep.subr.mxu0 0.0
      %290 = vmatpush1.msra.mxu0 %v218
      %291 = vmatprep.subr.mxu0 0.0
      %292 = vmatpush2.msra.mxu0 0.0
      %293 = vmatprep.subr.mxu0 0.0
      %294 = vmatpush2.msra.mxu0 0.0
      %295 = vmatprep.subr.mxu0 0.0
      %296 = vmatpush2.msra.mxu0 0.0
      %297 = vmatprep.subr.mxu0 0.0
      %298 = vmatpush2.msra.mxu0 0.0
      %299 = vmatprep.subr.mxu0 0.0
      %300 = vmatpush2.msra.mxu0 0.0
      %301 = vmatprep.subr.mxu0 0.0
      %302 = vmatpush2.msra.mxu0 0.0
      %303 = vmatprep.subr.mxu0 0.0
      %304 = vmatpush2.msra.mxu0 0.0
      %305 = vmatprep.subr.mxu0 0.0
      %306 = vmatpush2.msra.mxu0 0.0
      %307 = vmatprep.subr.mxu0 0.0
      %308 = vmatpush2.msra.mxu0 0.0
      %309 = vmatprep.subr.mxu0 0.0
      %310 = vmatpush2.msra.mxu0 0.0
      %311 = vmatprep.subr.mxu0 0.0
      %312 = vmatpush2.msra.mxu0 0.0
      %313 = vmatprep.subr.mxu0 0.0
      %314 = vmatpush2.msra.mxu0 0.0
      %315 = vmatprep.subr.mxu0 0.0
      %316 = vmatpush2.msra.mxu0 0.0
      %317 = vmatprep.subr.mxu0 0.0
      %318 = vmatpush2.msra.mxu0 0.0
      %319 = vmatprep.subr.mxu0 0.0
      %320 = vmatpush2.msra.mxu0 0.0
      %321 = vmatprep.subr.mxu0 0.0
      %322 = vmatpush2.msra.mxu0 0.0
      %323 = vmatprep.mubr.f32.mxu0 0.0
      %324 = vmatmul.mubr.f32.gmra.mxu0 %v232
      %v325 = vpop.f32.mrf.mxu0
      %v326 = vadd.f32 %v228, %v325
      %v327 = vpop.f32.mrf.mxu0
      %328 = vmatprep.mubr.f32.mxu0 0.0
      %329 = vmatmul.mubr.f32.gmra.mxu0 %v235
      %v330 = vpop.f32.mrf.mxu0
      %v331 = vadd.f32 %v228, %v330
      %v332 = vpop.f32.mrf.mxu0
      %333 = vmatprep.mubr.f32.mxu0 0.0
      %334 = vmatmul.mubr.f32.gmra.mxu0 %v238
      %v335 = vpop.f32.mrf.mxu0
      %v336 = vadd.f32 %v228, %v335
      %v337 = vpop.f32.mrf.mxu0
      %338 = vmatprep.mubr.f32.mxu0 0.0
      %339 = vmatmul.mubr.f32.gmra.mxu0 %v241
      %v340 = vpop.f32.mrf.mxu0
      %v341 = vadd.f32 %v228, %v340
      %v342 = vpop.f32.mrf.mxu0
      %343 = vmatprep.mubr.f32.mxu0 0.0
      %344 = vmatmul.mubr.f32.gmra.mxu0 %v244
      %v345 = vpop.f32.mrf.mxu0
      %v346 = vadd.f32 %v228, %v345
      %v347 = vpop.f32.mrf.mxu0
      %348 = vmatprep.mubr.f32.mxu0 0.0
      %349 = vmatmul.mubr.f32.gmra.mxu0 %v247
      %v350 = vpop.f32.mrf.mxu0
      %v351 = vadd.f32 %v228, %v350
      %v352 = vpop.f32.mrf.mxu0
      %353 = vmatprep.mubr.f32.mxu0 0.0
      %354 = vmatmul.mubr.f32.gmra.mxu0 %v250
      %v355 = vpop.f32.mrf.mxu0
      %v356 = vadd.f32 %v228, %v355
      %v357 = vpop.f32.mrf.mxu0
      %358 = vmatprep.mubr.f32.mxu0 0.0
      %359 = vmatmul.mubr.f32.gmra.mxu0 %v253
      %v360 = vpop.f32.mrf.mxu0
      %v361 = vadd.f32 %v228, %v360
      %v362 = vpop.f32.mrf.mxu0
      %363 = vdwg.mxu0
      %vm364 = vcmask 31744
      %365 = vst.msk [vmem:[%s208] sm:$0xff] %vm364, %v326
      %366 = vst.msk [vmem:[%s208 + $0x8] sm:$0xff] %vm364, %v331
      %367 = vst.msk [vmem:[%s208 + $0x10] sm:$0xff] %vm364, %v336
      %368 = vst.msk [vmem:[%s208 + $0x18] sm:$0xff] %vm364, %v341
      %369 = vst.msk [vmem:[%s208 + $0x20] sm:$0xff] %vm364, %v346
      %370 = vst.msk [vmem:[%s208 + $0x28] sm:$0xff] %vm364, %v351
      %371 = vst.msk [vmem:[%s208 + $0x30] sm:$0xff] %vm364, %v356
      %372 = vst.msk [vmem:[%s208 + $0x38] sm:$0xff] %vm364, %v361
      %s373 = smul.u32 8, %s19
      %p374 = scmp.lt.s32.totalorder %s18, 1
      %s375 = scalar_select %p374, %s18, 1
      %p376 = scmp.lt.s32.totalorder %s373, 7
      %s377 = scalar_select %p376, %s373, 7
      %s378 = smul.addr %s375, 8
      %s379 = sadd.s32 %s377, %s378
      %s380 = smul.addr %s379, 8
      %s381 = scalar_lea.vmem %s3, %s380
      // Predicated region
      $region33: #{_conv3x3_s2_forward.1} parent=31 // pred_check
        %p382 = pneg %p116
      $region34: #{_conv3x3_s2_forward.1} parent=31 // pred_check_branch
        %384 = sbr.rel (%p382) target = $region36
      $region35: #{_conv3x3_s2_forward.1} parent=31 // pred_region
        %s385 = smul.u32 8, %s19
      $region36: #{_conv3x3_s2_forward.1} parent=31 // pred_fallthru
        _
    $region32: #{_conv3x3_s2_forward.1} parent=5 // pred_fallthru
      _
    %p386 = scmp.le.s32.totalorder 2, %s9
    // Predicated region
    $region37: #{_conv3x3_s2_forward.1} parent=5 // pred_check
      %p387 = pneg %p386
    $region38: #{_conv3x3_s2_forward.1} parent=5 // pred_check_branch
      %389 = sbr.rel (%p387) target = $region40
    $region39: #{_conv3x3_s2_forward.1} parent=5 // pred_region
      %s390 = ssub.s32 %s9, 2
      // Predicated region
      $region41: #{_conv3x3_s2_forward.1} parent=39 // pred_check
        %p391 = pneg %p122
      $region42: #{_conv3x3_s2_forward.1} parent=39 // pred_check_branch
        %393 = sbr.rel (%p391) target = $region44
      $region43: #{_conv3x3_s2_forward.1} parent=39 // pred_region
        %s394 = smul.u32 8, %s21
        %p395 = scmp.lt.s32.totalorder %s20, 1
        %s396 = scalar_select %p395, %s20, 1
        %p397 = scmp.lt.s32.totalorder %s394, 7
        %s398 = scalar_select %p397, %s394, 7
        %s399 = smul.addr %s396, 8
        %s400 = sadd.s32 %s398, %s399
        %s401 = smul.addr %s400, 8
        %s402 = scalar_lea.vmem %s3, %s401
      $region44: #{_conv3x3_s2_forward.1} parent=39 // pred_fallthru
        _
    $region40: #{_conv3x3_s2_forward.1} parent=5 // pred_fallthru
      _
  $region6: #{_conv3x3_s2_forward.1} parent=0 // loop_footer
    %s13 = sadd.s32 1, %s9
  $region7: #{_conv3x3_s2_forward.1} parent=0 // loop_footer_branch
    %8 = sbr.rel target = $region3
  $region8: #{_conv3x3_s2_forward.1} parent=0 // loop_exit
    _

</llo_original>
